<compile_context>
chip_gen: v7x
topology: tpu7x:2x2x1
jax: 0.10.0
libtpu: 0.0.40
codegen_flags: <defaults>
</compile_context>

<pallas_src>
import functools

import jax
import jax.numpy as jnp
from jax.experimental import pallas as pl
from jax.experimental.pallas import tpu as pltpu


def _round_up(x, m):
    return (x + m - 1) // m * m


def _vmem_budget():
    # Generation-aware scoped-VMEM limit and per-tile input/temporary budget.
    # v5e/v6e: 128 MiB physical VMEM -> 64 MiB limit is safe and keeps big
    # row tiles for large C.  v7x: only 64 MiB per TensorCore -> stay at 32 MiB.
    limit = 32 * 1024 * 1024
    budget = 20 * 1024 * 1024
    try:
        info = pltpu.get_tpu_info()
        cap = getattr(info, "vmem_capacity_bytes", None)
        if cap is not None and cap >= 96 * 1024 * 1024:
            limit = 64 * 1024 * 1024
            budget = 40 * 1024 * 1024
    except Exception:
        pass  # unknown platform -> conservative defaults
    return limit, budget


def _choose_tile_rows(bs, num_classes, itemsize, budget_bytes, block_rows):
    if bs <= 8:
        # Full-extent first dim (legal even when not a multiple of 8).
        return bs
    if block_rows is not None:
        tb = max(8, _round_up(int(block_rows), 8))
    else:
        # Per-row VMEM footprint:
        #   2 inputs x 2 pipeline buffers (input dtype)  = 4 * C * itemsize
        #   ~6 full-tile f32 temporaries (two upcasts, e1, e2, diff, diff^2)
        bytes_per_row = num_classes * (4 * itemsize + 6 * 4)
        tb = budget_bytes // max(bytes_per_row, 1)
        tb = max(8, min(4096, (tb // 8) * 8))
        # Guarantee >= 2 grid steps so the "parallel" axis can shard across both
        # TensorCores on v7x (harmless elsewhere).
        tb = min(tb, _round_up(pl.cdiv(bs, 2), 8))
    # Never let a single block exceed the (rounded) batch extent.
    tb = min(tb, _round_up(bs, 8))
    return tb


def _class_dist_kernel(p1_ref, p2_ref, loss_ref, masksum_ref, *, score_thr, bs, tb):
    # Upcast in VMEM (inputs may be bf16 in HBM to halve bandwidth).
    p1 = p1_ref[...].astype(jnp.float32)
    p2 = p2_ref[...].astype(jnp.float32)

    # Softmax statistics (numerically stable).
    m1 = jnp.max(p1, axis=-1, keepdims=True)
    e1 = jnp.exp(p1 - m1)
    s1 = jnp.sum(e1, axis=-1, keepdims=True)

    m2 = jnp.max(p2, axis=-1, keepdims=True)
    e2 = jnp.exp(p2 - m2)
    s2 = jnp.sum(e2, axis=-1, keepdims=True)

    # Valid-row mask for the ragged final tile (no host-side padding; data in
    # the overhang region of the block is unspecified and must be masked out).
    row0 = pl.program_id(0) * tb
    row_ids = jax.lax.broadcasted_iota(jnp.int32, s1.shape, 0) + row0
    valid = row_ids < bs

    # score_k = max(softmax(p_k)) = 1 / s_k, so
    #   score2 > score1  <=>  s1 > s2          (s1, s2 > 0)
    #   score2 >= thr    <=>  s2 * thr <= 1.0
    # Deriving the mask from the sums keeps the threshold decision independent
    # of reciprocal rounding.
    mask_b = (s1 > s2) & (s2 * score_thr <= 1.0) & valid

    # Per-row normalization: mask no longer depends on these, so the approx
    # (EUP) reciprocal is fine and issues on an otherwise-idle slot.
    inv1 = pl.reciprocal(s1, approx=True)
    inv2 = pl.reciprocal(s2, approx=True)

    # MSELoss(reduction='none') = (softmax1 - softmax2)^2; reduce over classes
    # first, then apply the (TB, 1) mask per row (cheaper than a (TB, C)
    # broadcast multiply).  jnp.where kills any NaN/Inf from invalid rows.
    diff = e1 * inv1 - e2 * inv2
    row_sq = jnp.sum(diff * diff, axis=-1, keepdims=True)

    loss_ref[0, 0] = jnp.sum(jnp.where(mask_b, row_sq, 0.0))
    masksum_ref[0, 0] = jnp.sum(mask_b.astype(jnp.float32))


def class_dist_loss(pred1, pred2, score_thr=0.95, block_rows=None):
    assert pred1.shape == pred2.shape
    assert pred1.dtype == pred2.dtype
    bs, num_classes = pred1.shape
    itemsize = jnp.dtype(pred1.dtype).itemsize

    vmem_limit, budget = _vmem_budget()
    tb = _choose_tile_rows(bs, num_classes, itemsize, budget, block_rows)
    num_tiles = pl.cdiv(bs, tb)

    kernel = functools.partial(
        _class_dist_kernel, score_thr=float(score_thr), bs=bs, tb=tb
    )

    cost = pl.CostEstimate(
        flops=int(12 * bs * num_classes),
        transcendentals=int(2 * bs * num_classes),
        bytes_accessed=int(2 * bs * num_classes * itemsize + 8 * num_tiles),
    )

    loss_parts, mask_parts = pl.pallas_call(
        kernel,
        out_shape=(
            jax.ShapeDtypeStruct((num_tiles, 1), jnp.float32),
            jax.ShapeDtypeStruct((num_tiles, 1), jnp.float32),
        ),
        grid_spec=pltpu.PrefetchScalarGridSpec(
            num_scalar_prefetch=0,
            grid=(num_tiles,),
            in_specs=[
                # Full-extent class dim (legal even when C % 128 != 0): no
                # host-side pad pass, lane-dense loads.
                pl.BlockSpec((tb, num_classes), lambda i: (i, 0)),
                pl.BlockSpec((tb, num_classes), lambda i: (i, 0)),
            ],
            out_specs=[
                pl.BlockSpec((1, 1), lambda i: (i, 0), memory_space=pltpu.SMEM),
                pl.BlockSpec((1, 1), lambda i: (i, 0), memory_space=pltpu.SMEM),
            ],
        ),
        compiler_params=pltpu.CompilerParams(
            dimension_semantics=("parallel",),
            vmem_limit_bytes=vmem_limit,
        ),
        cost_estimate=cost,
    )(pred1, pred2)

    loss_sum = jnp.sum(loss_parts)
    mask_sum = jnp.sum(mask_parts)

    loss = loss_sum / jnp.float32(num_classes)
    mask_mean = mask_sum / jnp.float32(bs)
    # Count of rows with mask > 0; mask entries are exactly 0/1, round before
    # the int cast so accumulated-float drift can never truncate the count.
    num_active = jnp.round(mask_sum).astype(jnp.int32)
    return loss, bs, mask_mean, num_active


def _reference(pred1, pred2, score_thr=0.95):
    bs, num_classes = pred1.shape
    sm1 = jax.nn.softmax(pred1.astype(jnp.float32), axis=1)
    sm2 = jax.nn.softmax(pred2.astype(jnp.float32), axis=1)
    s1 = jnp.max(sm1, axis=-1)
    s2 = jnp.max(sm2, axis=-1)
    mask = ((s2 > s1).astype(jnp.float32) * (s2 >= score_thr).astype(jnp.float32))[
        :, None
    ]
    loss = ((sm1 - sm2) ** 2) * mask
    return loss.sum() / num_classes, bs, mask.mean(), int(jnp.sum(mask > 0))


if __name__ == "__main__":
    key = jax.random.PRNGKey(0)
    k1, k2, k3, k4 = jax.random.split(key, 4)

    # Case 1: aligned shapes (bs=8, C=128), single tile.
    bs, num_classes = 8, 128
    pred1 = jax.random.normal(k1, (bs, num_classes), dtype=jnp.float32)
    pred2 = 6.0 * jax.random.normal(k2, (bs, num_classes), dtype=jnp.float32)

    loss, out_bs, mask_mean, num_active = class_dist_loss(pred1, pred2)
    jax.block_until_ready((loss, mask_mean, num_active))
    r_loss, r_bs, r_mm, r_na = _reference(pred1, pred2)
    assert out_bs == r_bs
    assert jnp.allclose(loss, r_loss, atol=1e-3, rtol=1e-2)
    assert jnp.allclose(mask_mean, r_mm, atol=1e-6)
    assert int(num_active) == int(r_na)

    # Case 2: unaligned shapes (bs=20, C=100) with a small row-tile so the grid
    # has multiple steps and a ragged final tile -> exercises in-kernel row
    # masking + full-extent (non-128-multiple) class dim.
    bs2, nc2 = 20, 100
    p1b = jax.random.normal(k3, (bs2, nc2), dtype=jnp.float32)
    p2b = 6.0 * jax.random.normal(k4, (bs2, nc2), dtype=jnp.float32)
    r_loss2, r_bs2, r_mm2, r_na2 = _reference(p1b, p2b)

    loss2, out_bs2, mm2, na2 = class_dist_loss(p1b, p2b, block_rows=8)
    jax.block_until_ready((loss2, mm2, na2))
    assert out_bs2 == r_bs2
    assert jnp.allclose(loss2, r_loss2, atol=1e-3, rtol=1e-2)
    assert jnp.allclose(mm2, r_mm2, atol=1e-6)
    assert int(na2) == int(r_na2)

    # Case 2b: same inputs, auto tile selection (>= 2 tiles, ragged last tile).
    loss2b, _, mm2b, na2b = class_dist_loss(p1b, p2b)
    jax.block_until_ready((loss2b, mm2b, na2b))
    assert jnp.allclose(loss2b, r_loss2, atol=1e-3, rtol=1e-2)
    assert jnp.allclose(mm2b, r_mm2, atol=1e-6)
    assert int(na2b) == int(r_na2)

    # Case 3: bf16 inputs (halves HBM traffic; kernel upcasts in VMEM).
    loss3, _, mm3, na3 = class_dist_loss(
        pred1.astype(jnp.bfloat16), pred2.astype(jnp.bfloat16)
    )
    jax.block_until_ready((loss3, mm3, na3))
    assert bool(jnp.isfinite(loss3)) and 0.0 <= float(mm3) <= 1.0

    print("KERNEL_OK")
</pallas_src>

<mosaic_0001>
module attributes {stable_mosaic.version = 11 : i64} {
  func.func @_class_dist_kernel(%arg0: i32, %arg1: memref<8x128xf32, #tpu.memory_space<vmem>>, %arg2: memref<8x128xf32, #tpu.memory_space<vmem>>, %arg3: memref<1x1xf32, #tpu.memory_space<smem>>, %arg4: memref<1x1xf32, #tpu.memory_space<smem>>) attributes {dimension_semantics = [#tpu.dimension_semantics<parallel>], iteration_bounds = array<i64: 1>, scalar_prefetch = 0 : i64, scratch_operands = 0 : i64, tpu.core_type = #tpu.core_type<tc>, window_params = [{transform_indices = @transform_0, window_bounds = array<i64: 8, 128>}, {transform_indices = @transform_1, window_bounds = array<i64: 8, 128>}, {transform_indices = @transform_2, window_bounds = array<i64: 1, 1>}, {transform_indices = @transform_3, window_bounds = array<i64: 1, 1>}]} {
    %c0 = arith.constant 0 : index
    %c0_0 = arith.constant 0 : index
    %0 = vector.load %arg1[%c0, %c0_0] : memref<8x128xf32, #tpu.memory_space<vmem>>, vector<8x128xf32>
    %c0_1 = arith.constant 0 : index
    %c0_2 = arith.constant 0 : index
    %1 = vector.load %arg2[%c0_1, %c0_2] : memref<8x128xf32, #tpu.memory_space<vmem>>, vector<8x128xf32>
    %cst = arith.constant dense<0xFF800000> : vector<8xf32>
    %2 = vector.multi_reduction <maximumf>, %0, %cst [1] : vector<8x128xf32> to vector<8xf32>
    %3 = vector.shape_cast %2 : vector<8xf32> to vector<8x1xf32>
    %4 = vector.broadcast %3 : vector<8x1xf32> to vector<8x128xf32>
    %5 = arith.subf %0, %4 : vector<8x128xf32>
    %6 = math.exp %5 : vector<8x128xf32>
    %cst_3 = arith.constant dense<0.000000e+00> : vector<8xf32>
    %7 = vector.multi_reduction <add>, %6, %cst_3 [1] : vector<8x128xf32> to vector<8xf32>
    %8 = vector.shape_cast %7 : vector<8xf32> to vector<8x1xf32>
    %cst_4 = arith.constant dense<0xFF800000> : vector<8xf32>
    %9 = vector.multi_reduction <maximumf>, %1, %cst_4 [1] : vector<8x128xf32> to vector<8xf32>
    %10 = vector.shape_cast %9 : vector<8xf32> to vector<8x1xf32>
    %11 = vector.broadcast %10 : vector<8x1xf32> to vector<8x128xf32>
    %12 = arith.subf %1, %11 : vector<8x128xf32>
    %13 = math.exp %12 : vector<8x128xf32>
    %cst_5 = arith.constant dense<0.000000e+00> : vector<8xf32>
    %14 = vector.multi_reduction <add>, %13, %cst_5 [1] : vector<8x128xf32> to vector<8xf32>
    %15 = vector.shape_cast %14 : vector<8xf32> to vector<8x1xf32>
    %c8_i32 = arith.constant 8 : i32
    %16 = arith.muli %arg0, %c8_i32 : i32
    %17 = tpu.iota {dimensions = array<i32: 0>} : vector<8x1xi32>
    %18 = vector.broadcast %16 : i32 to vector<8x1xi32>
    %19 = arith.addi %17, %18 : vector<8x1xi32>
    %c8_i32_6 = arith.constant 8 : i32
    %20 = vector.broadcast %c8_i32_6 : i32 to vector<8x1xi32>
    %21 = arith.cmpi slt, %19, %20 : vector<8x1xi32>
    %22 = arith.cmpf ogt, %8, %15 : vector<8x1xf32>
    %cst_7 = arith.constant 0.949999988 : f32
    %23 = vector.broadcast %cst_7 : f32 to vector<8x1xf32>
    %24 = arith.mulf %15, %23 : vector<8x1xf32>
    %cst_8 = arith.constant 1.000000e+00 : f32
    %25 = vector.broadcast %cst_8 : f32 to vector<8x1xf32>
    %26 = arith.cmpf ole, %24, %25 : vector<8x1xf32>
    %27 = arith.andi %22, %26 : vector<8x1xi1>
    %28 = arith.andi %27, %21 : vector<8x1xi1>
    %29 = tpu.reciprocal %8 {approx = true} : vector<8x1xf32> -> vector<8x1xf32>
    %30 = tpu.reciprocal %15 {approx = true} : vector<8x1xf32> -> vector<8x1xf32>
    %31 = vector.broadcast %29 : vector<8x1xf32> to vector<8x128xf32>
    %32 = arith.mulf %6, %31 : vector<8x128xf32>
    %33 = vector.broadcast %30 : vector<8x1xf32> to vector<8x128xf32>
    %34 = arith.mulf %13, %33 : vector<8x128xf32>
    %35 = arith.subf %32, %34 : vector<8x128xf32>
    %36 = arith.mulf %35, %35 : vector<8x128xf32>
    %cst_9 = arith.constant dense<0.000000e+00> : vector<8xf32>
    %37 = vector.multi_reduction <add>, %36, %cst_9 [1] : vector<8x128xf32> to vector<8xf32>
    %38 = vector.shape_cast %37 : vector<8xf32> to vector<8x1xf32>
    %cst_10 = arith.constant 0.000000e+00 : f32
    %39 = vector.broadcast %cst_10 : f32 to vector<8x1xf32>
    %40 = arith.select %28, %38, %39 : vector<8x1xi1>, vector<8x1xf32>
    %41 = vector.shape_cast %40 : vector<8x1xf32> to vector<1x8x1xf32>
    %cst_11 = arith.constant dense<0.000000e+00> : vector<1xf32>
    %42 = vector.multi_reduction <add>, %41, %cst_11 [1, 2] : vector<1x8x1xf32> to vector<1xf32>
    %43 = vector.shape_cast %42 : vector<1xf32> to vector<1x1x1xf32>
    %44 = vector.extract %43[0, 0, 0] : f32 from vector<1x1x1xf32>
    %c0_12 = arith.constant 0 : index
    %c0_13 = arith.constant 0 : index
    %45 = memref.load %arg3[%c0_12, %c0_13] : memref<1x1xf32, #tpu.memory_space<smem>>
    memref.store %44, %arg3[%c0_12, %c0_13] : memref<1x1xf32, #tpu.memory_space<smem>>
    %46 = arith.extui %28 : vector<8x1xi1> to vector<8x1xi32>
    %47 = arith.sitofp %46 : vector<8x1xi32> to vector<8x1xf32>
    %48 = vector.shape_cast %47 : vector<8x1xf32> to vector<1x8x1xf32>
    %cst_14 = arith.constant dense<0.000000e+00> : vector<1xf32>
    %49 = vector.multi_reduction <add>, %48, %cst_14 [1, 2] : vector<1x8x1xf32> to vector<1xf32>
    %50 = vector.shape_cast %49 : vector<1xf32> to vector<1x1x1xf32>
    %51 = vector.extract %50[0, 0, 0] : f32 from vector<1x1x1xf32>
    %c0_15 = arith.constant 0 : index
    %c0_16 = arith.constant 0 : index
    %52 = memref.load %arg4[%c0_15, %c0_16] : memref<1x1xf32, #tpu.memory_space<smem>>
    memref.store %51, %arg4[%c0_15, %c0_16] : memref<1x1xf32, #tpu.memory_space<smem>>
    return
  }
  func.func @transform_0(%arg0: i32) -> (i32, i32) {
    %c0_i32 = arith.constant 0 : i32
    %c0_i32_0 = arith.constant 0 : i32
    return %arg0, %c0_i32 : i32, i32
  }
  func.func @transform_1(%arg0: i32) -> (i32, i32) {
    %c0_i32 = arith.constant 0 : i32
    %c0_i32_0 = arith.constant 0 : i32
    return %arg0, %c0_i32 : i32, i32
  }
  func.func @transform_2(%arg0: i32) -> (i32, i32) {
    %c0_i32 = arith.constant 0 : i32
    %c0_i32_0 = arith.constant 0 : i32
    return %arg0, %c0_i32 : i32, i32
  }
  func.func @transform_3(%arg0: i32) -> (i32, i32) {
    %c0_i32 = arith.constant 0 : i32
    %c0_i32_0 = arith.constant 0 : i32
    return %arg0, %c0_i32 : i32, i32
  }
}

</mosaic_0001>

<llo_original>
// kernel: tpu_custom_call.1
$region0: #{tpu_custom_call.1}
  #allocation0 [shape = 'u32[]', space=smem, size = 0x4, offset = 0x4, fixed_abs, tag = 'smem constant byte address 0x4 - core index']
  #allocation1 [shape = 'u32[144,128]{1,0:T(1,128)}', space=vmem, size = 0x12000, scoped, tag = 'internal scratch']
  %s0 = inlined_call_operand.hbm [shape: f32[8,128], index: 0, kind: input, shape index: {}]
  %s1 = inlined_call_operand.hbm [shape: f32[8,128], index: 1, kind: input, shape index: {}]
  %s2 = inlined_call_operand.hbm [shape: f32[1,1], index: 2, kind: output, shape index: {0}]
  %s3 = inlined_call_operand.hbm [shape: f32[1,1], index: 3, kind: output, shape index: {1}]
  %4 = xla_tuple %s2, %s3
  %s5 = sld [smem:[#allocation0]]
  $region34: #{tpu_custom_call.1} parent=0
    _
  %s7 = ssub.s32 1, %s5
  %s8 = scalar_select 0, %s7, %s5
  $region1: #{tpu_custom_call.1} parent=0
    #allocation2 [shape = 'u8[4096]{0}', space=vmem, size = 0x1000, scoped, tag = 'input window, operand 0, single buffered']
    #allocation3 [shape = 's32[1]{0}', space=sflag, size = 0x4, scoped, tag = 'scoped memory for tpu_custom_call.1']
    #allocation4 [shape = 's32[1]{0}', space=sflag, size = 0x4, scoped, tag = 'scoped memory for tpu_custom_call.1']
    #allocation5 [shape = 'u8[4096]{0}', space=vmem, size = 0x1000, scoped, tag = 'input window, operand 1, single buffered']
    #allocation6 [shape = 's32[1]{0}', space=sflag, size = 0x4, scoped, tag = 'scoped memory for tpu_custom_call.1']
    #allocation7 [shape = 'u8[512]{0}', space=smem, size = 0x200, scoped, tag = 'output window, operand 0, single buffered']
    #allocation8 [shape = 'u8[512]{0}', space=smem, size = 0x200, scoped, tag = 'output window, operand 1, single buffered']
    #allocation9 [shape = 's32[1]{0}', space=sflag, size = 0x4, scoped, tag = 'scoped memory for tpu_custom_call.1']
    %9 = vsyncpa [#allocation3], 0
    %10 = vsyncpa [#allocation6], 0
    %11 = vsyncpa [#allocation4], 0
    %12 = vsyncpa [#allocation9], 0
    // Predicated region
    $region2: #{tpu_custom_call.1} parent=1 // pred_check
      _
    $region3: #{tpu_custom_call.1} parent=1 // pred_check_branch
      %14 = sbr.rel (0) target = $region5
    $region4: #{tpu_custom_call.1} parent=1 // pred_region
      %s16 = ssub.s32 128, 128
      %17 = vsyncadd [#allocation3], %s16
      %s19 = sshll.u32 [#allocation2], 4
      %s20 = int_to_ptr.vmem [resolvable:$true] %s19
      %22 = dma.hbm_to_vmem [thread:$0]  %s0, 128, %s20, [#allocation3]
    $region5: #{tpu_custom_call.1} parent=1 // pred_fallthru
      _
    // Predicated region
    $region6: #{tpu_custom_call.1} parent=1 // pred_check
      _
    $region7: #{tpu_custom_call.1} parent=1 // pred_check_branch
      %24 = sbr.rel (0) target = $region9
    $region8: #{tpu_custom_call.1} parent=1 // pred_region
      %s26 = ssub.s32 128, 128
      %27 = vsyncadd [#allocation6], %s26
      %s29 = sshll.u32 [#allocation5], 4
      %s30 = int_to_ptr.vmem [resolvable:$true] %s29
      %32 = dma.hbm_to_vmem [thread:$0]  %s1, 128, %s30, [#allocation6]
    $region9: #{tpu_custom_call.1} parent=1 // pred_fallthru
      _
    // Predicated region
    $region10: #{tpu_custom_call.1} parent=1 // pred_check
      _
    $region11: #{tpu_custom_call.1} parent=1 // pred_check_branch
      %34 = sbr.rel (0) target = $region13
    $region12: #{tpu_custom_call.1} parent=1 // pred_region
      %35 = dma.done [#allocation3], 128
    $region13: #{tpu_custom_call.1} parent=1 // pred_fallthru
      _
    // Predicated region
    $region14: #{tpu_custom_call.1} parent=1 // pred_check
      _
    $region15: #{tpu_custom_call.1} parent=1 // pred_check_branch
      %37 = sbr.rel (0) target = $region17
    $region16: #{tpu_custom_call.1} parent=1 // pred_region
      %38 = dma.done [#allocation6], 128
    $region17: #{tpu_custom_call.1} parent=1 // pred_fallthru
      _
    %v39 = vld [vmem:[#allocation2] sm:$0xff]
    %v40 = vld [vmem:[#allocation5] sm:$0xff]
    %41 = vmax.xlane.f32.xlu0 %v39
    %v42 = vpop.xlane.xlu0 %41
    %v43 = vsub.f32 %v39, %v42
    %v44 = vmul.f32 %v43, 1.442695
    %v45 = vpow.pop %v44
    %46 = vadd.xlane.f32.xlu0 %v45
    %v47 = vpop.xlane.xlu0 %46
    %48 = vmax.xlane.f32.xlu0 %v40
    %v49 = vpop.xlane.xlu0 %48
    %v50 = vsub.f32 %v40, %v49
    %v51 = vmul.f32 %v50, 1.442695
    %v52 = vpow.pop %v51
    %53 = vadd.xlane.f32.xlu0 %v52
    %v54 = vpop.xlane.xlu0 %53
    %s55 = smul.u32 0, 8
    %v56 = vlaneseq
    %v57 = vshrl.u32 %v56, 7
    %v58 = vstv %s55
    %v59 = vadd.s32 %v57, %v58
    %vm60 = vcmp.lt.s32.totalorder %v59, 8
    %vm61 = vcmp.gt.f32.partialorder %v47, %v54
    %v62 = vmul.f32 %v54, 0.95
    %vm63 = vcmp.le.f32.partialorder %v62, 1.0
    %vm64 = vmand %vm61, %vm63
    %vm65 = vmand %vm64, %vm60
    %v66 = vrcp.pop %v47
    %v67 = vrcp.pop %v54
    %v68 = vmul.f32 %v45, %v66
    %v69 = vmul.f32 %v52, %v67
    %v70 = vsub.f32 %v68, %v69
    %v71 = vmul.f32 %v70, %v70
    %72 = vadd.xlane.f32.xlu0 %v71
    %v73 = vpop.xlane.xlu0 %72
    %v74 = vsel %vm65, %v73, 0.0
    %vm75 = vcmask 7168
    %v76 = vsel %vm75, %v74, 0.0
    %77 = vadd.xlane.f32.xlu0 %v76
    %v78 = vpop.xlane.xlu0 %77
    %v79 = vrot.slane %v78, 4
    %v80 = vadd.f32 %v78, %v79
    %v81 = vrot.slane %v80, 2
    %v82 = vadd.f32 %v80, %v81
    %v83 = vrot.slane %v82, 1
    %v84 = vadd.f32 %v82, %v83
    %s85 = vtos %v84
    %s86 = scalar_lea.smem [#allocation7], 0
    %87 = sst [smem:[%s86]] %s85
    %v88 = vsel %vm65, 1, 0
    %v89 = vcvt.s32.f32 %v88
    %v90 = vsel %vm75, %v89, 0.0
    %91 = vadd.xlane.f32.xlu0 %v90
    %v92 = vpop.xlane.xlu0 %91
    %v93 = vrot.slane %v92, 4
    %v94 = vadd.f32 %v92, %v93
    %v95 = vrot.slane %v94, 2
    %v96 = vadd.f32 %v94, %v95
    %v97 = vrot.slane %v96, 1
    %v98 = vadd.f32 %v96, %v97
    %s99 = vtos %v98
    %s100 = scalar_lea.smem [#allocation8], 0
    %101 = sst [smem:[%s100]] %s99
    // Predicated region
    $region18: #{tpu_custom_call.1} parent=1 // pred_check
      _
    $region19: #{tpu_custom_call.1} parent=1 // pred_check_branch
      %103 = sbr.rel (0) target = $region21
    $region20: #{tpu_custom_call.1} parent=1 // pred_region
      %s105 = ssub.s32 16, 16
      %106 = vsyncadd [#allocation4], %s105
      %109 = dma.smem_to_hbm [#allocation7], 16, %s2, [#allocation4]
    $region21: #{tpu_custom_call.1} parent=1 // pred_fallthru
      _
    // Predicated region
    $region22: #{tpu_custom_call.1} parent=1 // pred_check
      _
    $region23: #{tpu_custom_call.1} parent=1 // pred_check_branch
      %111 = sbr.rel (0) target = $region25
    $region24: #{tpu_custom_call.1} parent=1 // pred_region
      %s113 = ssub.s32 16, 16
      %114 = vsyncadd [#allocation9], %s113
      %117 = dma.smem_to_hbm [#allocation8], 16, %s3, [#allocation9]
    $region25: #{tpu_custom_call.1} parent=1 // pred_fallthru
      _
    // Predicated region
    $region26: #{tpu_custom_call.1} parent=1 // pred_check
      _
    $region27: #{tpu_custom_call.1} parent=1 // pred_check_branch
      %119 = sbr.rel (0) target = $region29
    $region28: #{tpu_custom_call.1} parent=1 // pred_region
      %120 = dma.done [#allocation4], 16
    $region29: #{tpu_custom_call.1} parent=1 // pred_fallthru
      _
    // Predicated region
    $region30: #{tpu_custom_call.1} parent=1 // pred_check
      _
    $region31: #{tpu_custom_call.1} parent=1 // pred_check_branch
      %122 = sbr.rel (0) target = $region33
    $region32: #{tpu_custom_call.1} parent=1 // pred_region
      %123 = dma.done [#allocation9], 16
    $region33: #{tpu_custom_call.1} parent=1 // pred_fallthru
      _
    %124 = sfence
    %125 = vsyncpa [#allocation3], 1
    %126 = vsyncpa [#allocation6], 1
    %127 = vsyncpa [#allocation4], 1
    %128 = vsyncpa [#allocation9], 1

</llo_original>
